<compile_context>
chip_gen: v7x
topology: tpu7x:2x2x1
jax: 0.10.0
libtpu: 0.0.40
codegen_flags: <defaults>
</compile_context>

<pallas_src>
import functools

import jax
import jax.numpy as jnp
from jax.experimental import pallas as pl
from jax.experimental.pallas import tpu as pltpu

ROWS_PER_BLOCK = 8   # sublane-aligned output block height
LANE = 128           # f32 lane width


def _round_up(x: int, m: int) -> int:
    return (x + m - 1) // m * m


def _gather_rows_kernel(idx_ref, table_hbm, out_ref, row_buf, sems):
    """Gather ROWS_PER_BLOCK arbitrary table rows for this grid step.

    idx_ref   : SMEM int32[B_pad]              (scalar prefetch)
    table_hbm : (V, H_pad) f32, left in HBM    (memory_space=pl.ANY)
    out_ref   : (ROWS_PER_BLOCK, H_pad) VMEM output block
    row_buf   : (ROWS_PER_BLOCK, H_pad) VMEM scratch (DMA landing zone)
    sems      : DMA semaphores, one per row
    """
    base = pl.program_id(0) * ROWS_PER_BLOCK
    n_rows = table_hbm.shape[0]

    # Issue all row DMAs up front (HBM -> VMEM), then wait.  Only the
    # requested rows move — never the whole table.
    for r in range(ROWS_PER_BLOCK):
        row = idx_ref[base + r]
        # No runtime bounds check on DMA'd refs: clamp to stay in-table.
        row = jnp.clip(row, 0, n_rows - 1)
        pltpu.make_async_copy(
            table_hbm.at[pl.ds(row, 1), :],
            row_buf.at[pl.ds(r, 1), :],
            sems.at[r],
        ).start()

    for r in range(ROWS_PER_BLOCK):
        pltpu.make_async_copy(
            table_hbm.at[pl.ds(0, 1), :],   # same shape as the start; wait on sem
            row_buf.at[pl.ds(r, 1), :],
            sems.at[r],
        ).wait()

    # Single lane-dense (8, 128k) store: no masked partial stores.
    out_ref[...] = row_buf[...]


@jax.jit
def _gather_rows(table: jax.Array, idx_padded: jax.Array) -> jax.Array:
    """Return table[idx_padded, :] via a Pallas TPU kernel.

    table:      (V, H_pad) float32, H_pad a multiple of 128.
    idx_padded: (B_pad,)   int32,   B_pad a multiple of ROWS_PER_BLOCK.
    """
    V, H_pad = table.shape
    B_pad = idx_padded.shape[0]
    grid = (B_pad // ROWS_PER_BLOCK,)
    return pl.pallas_call(
        _gather_rows_kernel,
        out_shape=jax.ShapeDtypeStruct((B_pad, H_pad), table.dtype),
        grid_spec=pltpu.PrefetchScalarGridSpec(
            num_scalar_prefetch=1,
            grid=grid,
            in_specs=[pl.BlockSpec(memory_space=pl.ANY)],   # table stays in HBM
            out_specs=pl.BlockSpec(
                (ROWS_PER_BLOCK, H_pad), lambda b, idx_ref: (b, 0)),
            scratch_shapes=[
                pltpu.VMEM((ROWS_PER_BLOCK, H_pad), table.dtype),
                pltpu.SemaphoreType.DMA((ROWS_PER_BLOCK,)),
            ],
        ),
        compiler_params=pltpu.CompilerParams(
            dimension_semantics=("arbitrary",)),
    )(idx_padded, table)


class InfiniteEmbeddingPallas:
    """JAX/Pallas equivalent of the PyTorch `infiniteEmbedding` module."""

    def __init__(self, hidden_dim: int, capacity: int = 64, seed: int = 0):
        self.hidden_dim = hidden_dim
        self.capacity = _round_up(max(capacity, ROWS_PER_BLOCK), ROWS_PER_BLOCK)
        self._h_pad = _round_up(max(hidden_dim, LANE), LANE)
        self._key_to_idx = {}  # mirrors `_emb_dict` key bookkeeping (host side)
        # Deterministic stand-in for the lazily created torch.rand((1, H))
        # parameters: row k of this table is the embedding of the k-th novel
        # key.  torch.rand == uniform [0, 1), float32.
        self.table = jax.random.uniform(
            jax.random.PRNGKey(seed), (self.capacity, self._h_pad),
            dtype=jnp.float32)
        # TODO(synk): requires_grad / nn.Parameter autograd registration has no
        # kernel-side equivalent; the table is a plain jax.Array here.

    def _index_of(self, key: str) -> int:
        idx = self._key_to_idx.get(key)
        if idx is None:
            if len(self._key_to_idx) >= self.capacity:
                raise ValueError("exceeded preallocated key capacity")
            idx = len(self._key_to_idx)
            self._key_to_idx[key] = idx
        return idx

    def lookup(self, keys) -> jax.Array:
        """Batched lookup: one pallas_call for a list of keys -> (B, hidden_dim)."""
        idxs = [self._index_of(k) for k in keys]
        b = len(idxs)
        b_pad = _round_up(max(b, ROWS_PER_BLOCK), ROWS_PER_BLOCK)
        idx_arr = jnp.asarray(idxs + [0] * (b_pad - b), dtype=jnp.int32)
        out = _gather_rows(self.table, idx_arr)
        return out[:b, :self.hidden_dim]

    def __call__(self, key: str) -> jax.Array:
        return self[key]

    def __getitem__(self, key: str) -> jax.Array:
        # Original module semantics: single key -> (1, hidden_dim).
        return self.lookup([key])


if __name__ == "__main__":
    hidden_dim = 32
    emb = InfiniteEmbeddingPallas(hidden_dim=hidden_dim, capacity=16, seed=0)

    e_foo = emb("foo")        # creates new embedding for "foo"
    e_bar = emb("bar")        # creates new embedding for "bar"
    e_foo_again = emb("foo")  # must return the identical embedding
    batch = emb.lookup(["foo", "bar", "baz", "foo"])  # one kernel call, 4 keys

    jax.block_until_ready((e_foo, e_bar, e_foo_again, batch))

    assert e_foo.shape == (1, hidden_dim)
    assert e_foo.dtype == jnp.float32
    assert batch.shape == (4, hidden_dim)
    # Same key -> identical embedding; different key -> a different row.
    assert bool(jnp.array_equal(e_foo, e_foo_again))
    assert bool(jnp.array_equal(e_foo, emb.table[0:1, :hidden_dim]))
    assert bool(jnp.array_equal(e_bar, emb.table[1:2, :hidden_dim]))
    assert bool(jnp.array_equal(batch[0:1], e_foo))
    assert bool(jnp.array_equal(batch[1:2], e_bar))
    assert bool(jnp.array_equal(batch[3:4], e_foo))
    assert not bool(jnp.array_equal(e_foo, e_bar))

    print("KERNEL_OK")
</pallas_src>

<mosaic_0001>
module attributes {stable_mosaic.version = 11 : i64} {
  func.func @_gather_rows_kernel(%arg0: i32, %arg1: memref<8xi32, #tpu.memory_space<smem>>, %arg2: memref<16x128xf32, #tpu.memory_space<any>>, %arg3: memref<8x128xf32, #tpu.memory_space<vmem>>, %arg4: memref<8x128xf32, #tpu.memory_space<vmem>>, %arg5: memref<8x!tpu.dma_semaphore, #tpu.memory_space<semaphore_mem>>) attributes {dimension_semantics = [#tpu.dimension_semantics<arbitrary>], iteration_bounds = array<i64: 1>, scalar_prefetch = 1 : i64, scratch_operands = 2 : i64, tpu.core_type = #tpu.core_type<tc>, window_params = [{}, {transform_indices = @transform_1, window_bounds = array<i64: 8, 128>}]} {
    %c8_i32 = arith.constant 8 : i32
    %0 = arith.muli %arg0, %c8_i32 : i32
    %c0_i32 = arith.constant 0 : i32
    %1 = arith.addi %0, %c0_i32 : i32
    %2 = arith.index_cast %1 : i32 to index
    %3 = memref.load %arg1[%2] : memref<8xi32, #tpu.memory_space<smem>>
    %c0_i32_0 = arith.constant 0 : i32
    %c15_i32 = arith.constant 15 : i32
    %4 = arith.maxsi %c0_i32_0, %3 : i32
    %5 = arith.minsi %c15_i32, %4 : i32
    %c0_i32_1 = arith.constant 0 : i32
    %c0_i32_2 = arith.constant 0 : i32
    %6 = tpu.memref_slice %arg2[%5, %c0_i32_2] : memref<16x128xf32, #tpu.memory_space<any>> -> memref<1x128xf32, #tpu.memory_space<any>>
    %c0_i32_3 = arith.constant 0 : i32
    %c0_i32_4 = arith.constant 0 : i32
    %7 = tpu.memref_slice %arg4[%c0_i32_3, %c0_i32_4] : memref<8x128xf32, #tpu.memory_space<vmem>> -> memref<1x128xf32, #tpu.memory_space<vmem>>
    %8 = tpu.memref_slice %arg5[%c0_i32_1] : memref<8x!tpu.dma_semaphore, #tpu.memory_space<semaphore_mem>> -> memref<1x!tpu.dma_semaphore, #tpu.memory_space<semaphore_mem>>
    %9 = tpu.memref_squeeze %8 : memref<1x!tpu.dma_semaphore, #tpu.memory_space<semaphore_mem>> -> memref<!tpu.dma_semaphore, #tpu.memory_space<semaphore_mem>>
    tpu.enqueue_dma source(%6 : memref<1x128xf32, #tpu.memory_space<any>>) target(%7 : memref<1x128xf32, #tpu.memory_space<vmem>>) target_semaphore(%9 : memref<!tpu.dma_semaphore, #tpu.memory_space<semaphore_mem>>)
    %c1_i32 = arith.constant 1 : i32
    %10 = arith.addi %0, %c1_i32 : i32
    %11 = arith.index_cast %10 : i32 to index
    %12 = memref.load %arg1[%11] : memref<8xi32, #tpu.memory_space<smem>>
    %c0_i32_5 = arith.constant 0 : i32
    %c15_i32_6 = arith.constant 15 : i32
    %13 = arith.maxsi %c0_i32_5, %12 : i32
    %14 = arith.minsi %c15_i32_6, %13 : i32
    %c1_i32_7 = arith.constant 1 : i32
    %c0_i32_8 = arith.constant 0 : i32
    %15 = tpu.memref_slice %arg2[%14, %c0_i32_8] : memref<16x128xf32, #tpu.memory_space<any>> -> memref<1x128xf32, #tpu.memory_space<any>>
    %c1_i32_9 = arith.constant 1 : i32
    %c0_i32_10 = arith.constant 0 : i32
    %16 = tpu.memref_slice %arg4[%c1_i32_9, %c0_i32_10] : memref<8x128xf32, #tpu.memory_space<vmem>> -> memref<1x128xf32, #tpu.memory_space<vmem>>
    %17 = tpu.memref_slice %arg5[%c1_i32_7] : memref<8x!tpu.dma_semaphore, #tpu.memory_space<semaphore_mem>> -> memref<1x!tpu.dma_semaphore, #tpu.memory_space<semaphore_mem>>
    %18 = tpu.memref_squeeze %17 : memref<1x!tpu.dma_semaphore, #tpu.memory_space<semaphore_mem>> -> memref<!tpu.dma_semaphore, #tpu.memory_space<semaphore_mem>>
    tpu.enqueue_dma source(%15 : memref<1x128xf32, #tpu.memory_space<any>>) target(%16 : memref<1x128xf32, #tpu.memory_space<vmem>>) target_semaphore(%18 : memref<!tpu.dma_semaphore, #tpu.memory_space<semaphore_mem>>)
    %c2_i32 = arith.constant 2 : i32
    %19 = arith.addi %0, %c2_i32 : i32
    %20 = arith.index_cast %19 : i32 to index
    %21 = memref.load %arg1[%20] : memref<8xi32, #tpu.memory_space<smem>>
    %c0_i32_11 = arith.constant 0 : i32
    %c15_i32_12 = arith.constant 15 : i32
    %22 = arith.maxsi %c0_i32_11, %21 : i32
    %23 = arith.minsi %c15_i32_12, %22 : i32
    %c2_i32_13 = arith.constant 2 : i32
    %c0_i32_14 = arith.constant 0 : i32
    %24 = tpu.memref_slice %arg2[%23, %c0_i32_14] : memref<16x128xf32, #tpu.memory_space<any>> -> memref<1x128xf32, #tpu.memory_space<any>>
    %c2_i32_15 = arith.constant 2 : i32
    %c0_i32_16 = arith.constant 0 : i32
    %25 = tpu.memref_slice %arg4[%c2_i32_15, %c0_i32_16] : memref<8x128xf32, #tpu.memory_space<vmem>> -> memref<1x128xf32, #tpu.memory_space<vmem>>
    %26 = tpu.memref_slice %arg5[%c2_i32_13] : memref<8x!tpu.dma_semaphore, #tpu.memory_space<semaphore_mem>> -> memref<1x!tpu.dma_semaphore, #tpu.memory_space<semaphore_mem>>
    %27 = tpu.memref_squeeze %26 : memref<1x!tpu.dma_semaphore, #tpu.memory_space<semaphore_mem>> -> memref<!tpu.dma_semaphore, #tpu.memory_space<semaphore_mem>>
    tpu.enqueue_dma source(%24 : memref<1x128xf32, #tpu.memory_space<any>>) target(%25 : memref<1x128xf32, #tpu.memory_space<vmem>>) target_semaphore(%27 : memref<!tpu.dma_semaphore, #tpu.memory_space<semaphore_mem>>)
    %c3_i32 = arith.constant 3 : i32
    %28 = arith.addi %0, %c3_i32 : i32
    %29 = arith.index_cast %28 : i32 to index
    %30 = memref.load %arg1[%29] : memref<8xi32, #tpu.memory_space<smem>>
    %c0_i32_17 = arith.constant 0 : i32
    %c15_i32_18 = arith.constant 15 : i32
    %31 = arith.maxsi %c0_i32_17, %30 : i32
    %32 = arith.minsi %c15_i32_18, %31 : i32
    %c3_i32_19 = arith.constant 3 : i32
    %c0_i32_20 = arith.constant 0 : i32
    %33 = tpu.memref_slice %arg2[%32, %c0_i32_20] : memref<16x128xf32, #tpu.memory_space<any>> -> memref<1x128xf32, #tpu.memory_space<any>>
    %c3_i32_21 = arith.constant 3 : i32
    %c0_i32_22 = arith.constant 0 : i32
    %34 = tpu.memref_slice %arg4[%c3_i32_21, %c0_i32_22] : memref<8x128xf32, #tpu.memory_space<vmem>> -> memref<1x128xf32, #tpu.memory_space<vmem>>
    %35 = tpu.memref_slice %arg5[%c3_i32_19] : memref<8x!tpu.dma_semaphore, #tpu.memory_space<semaphore_mem>> -> memref<1x!tpu.dma_semaphore, #tpu.memory_space<semaphore_mem>>
    %36 = tpu.memref_squeeze %35 : memref<1x!tpu.dma_semaphore, #tpu.memory_space<semaphore_mem>> -> memref<!tpu.dma_semaphore, #tpu.memory_space<semaphore_mem>>
    tpu.enqueue_dma source(%33 : memref<1x128xf32, #tpu.memory_space<any>>) target(%34 : memref<1x128xf32, #tpu.memory_space<vmem>>) target_semaphore(%36 : memref<!tpu.dma_semaphore, #tpu.memory_space<semaphore_mem>>)
    %c4_i32 = arith.constant 4 : i32
    %37 = arith.addi %0, %c4_i32 : i32
    %38 = arith.index_cast %37 : i32 to index
    %39 = memref.load %arg1[%38] : memref<8xi32, #tpu.memory_space<smem>>
    %c0_i32_23 = arith.constant 0 : i32
    %c15_i32_24 = arith.constant 15 : i32
    %40 = arith.maxsi %c0_i32_23, %39 : i32
    %41 = arith.minsi %c15_i32_24, %40 : i32
    %c4_i32_25 = arith.constant 4 : i32
    %c0_i32_26 = arith.constant 0 : i32
    %42 = tpu.memref_slice %arg2[%41, %c0_i32_26] : memref<16x128xf32, #tpu.memory_space<any>> -> memref<1x128xf32, #tpu.memory_space<any>>
    %c4_i32_27 = arith.constant 4 : i32
    %c0_i32_28 = arith.constant 0 : i32
    %43 = tpu.memref_slice %arg4[%c4_i32_27, %c0_i32_28] : memref<8x128xf32, #tpu.memory_space<vmem>> -> memref<1x128xf32, #tpu.memory_space<vmem>>
    %44 = tpu.memref_slice %arg5[%c4_i32_25] : memref<8x!tpu.dma_semaphore, #tpu.memory_space<semaphore_mem>> -> memref<1x!tpu.dma_semaphore, #tpu.memory_space<semaphore_mem>>
    %45 = tpu.memref_squeeze %44 : memref<1x!tpu.dma_semaphore, #tpu.memory_space<semaphore_mem>> -> memref<!tpu.dma_semaphore, #tpu.memory_space<semaphore_mem>>
    tpu.enqueue_dma source(%42 : memref<1x128xf32, #tpu.memory_space<any>>) target(%43 : memref<1x128xf32, #tpu.memory_space<vmem>>) target_semaphore(%45 : memref<!tpu.dma_semaphore, #tpu.memory_space<semaphore_mem>>)
    %c5_i32 = arith.constant 5 : i32
    %46 = arith.addi %0, %c5_i32 : i32
    %47 = arith.index_cast %46 : i32 to index
    %48 = memref.load %arg1[%47] : memref<8xi32, #tpu.memory_space<smem>>
    %c0_i32_29 = arith.constant 0 : i32
    %c15_i32_30 = arith.constant 15 : i32
    %49 = arith.maxsi %c0_i32_29, %48 : i32
    %50 = arith.minsi %c15_i32_30, %49 : i32
    %c5_i32_31 = arith.constant 5 : i32
    %c0_i32_32 = arith.constant 0 : i32
    %51 = tpu.memref_slice %arg2[%50, %c0_i32_32] : memref<16x128xf32, #tpu.memory_space<any>> -> memref<1x128xf32, #tpu.memory_space<any>>
    %c5_i32_33 = arith.constant 5 : i32
    %c0_i32_34 = arith.constant 0 : i32
    %52 = tpu.memref_slice %arg4[%c5_i32_33, %c0_i32_34] : memref<8x128xf32, #tpu.memory_space<vmem>> -> memref<1x128xf32, #tpu.memory_space<vmem>>
    %53 = tpu.memref_slice %arg5[%c5_i32_31] : memref<8x!tpu.dma_semaphore, #tpu.memory_space<semaphore_mem>> -> memref<1x!tpu.dma_semaphore, #tpu.memory_space<semaphore_mem>>
    %54 = tpu.memref_squeeze %53 : memref<1x!tpu.dma_semaphore, #tpu.memory_space<semaphore_mem>> -> memref<!tpu.dma_semaphore, #tpu.memory_space<semaphore_mem>>
    tpu.enqueue_dma source(%51 : memref<1x128xf32, #tpu.memory_space<any>>) target(%52 : memref<1x128xf32, #tpu.memory_space<vmem>>) target_semaphore(%54 : memref<!tpu.dma_semaphore, #tpu.memory_space<semaphore_mem>>)
    %c6_i32 = arith.constant 6 : i32
    %55 = arith.addi %0, %c6_i32 : i32
    %56 = arith.index_cast %55 : i32 to index
    %57 = memref.load %arg1[%56] : memref<8xi32, #tpu.memory_space<smem>>
    %c0_i32_35 = arith.constant 0 : i32
    %c15_i32_36 = arith.constant 15 : i32
    %58 = arith.maxsi %c0_i32_35, %57 : i32
    %59 = arith.minsi %c15_i32_36, %58 : i32
    %c6_i32_37 = arith.constant 6 : i32
    %c0_i32_38 = arith.constant 0 : i32
    %60 = tpu.memref_slice %arg2[%59, %c0_i32_38] : memref<16x128xf32, #tpu.memory_space<any>> -> memref<1x128xf32, #tpu.memory_space<any>>
    %c6_i32_39 = arith.constant 6 : i32
    %c0_i32_40 = arith.constant 0 : i32
    %61 = tpu.memref_slice %arg4[%c6_i32_39, %c0_i32_40] : memref<8x128xf32, #tpu.memory_space<vmem>> -> memref<1x128xf32, #tpu.memory_space<vmem>>
    %62 = tpu.memref_slice %arg5[%c6_i32_37] : memref<8x!tpu.dma_semaphore, #tpu.memory_space<semaphore_mem>> -> memref<1x!tpu.dma_semaphore, #tpu.memory_space<semaphore_mem>>
    %63 = tpu.memref_squeeze %62 : memref<1x!tpu.dma_semaphore, #tpu.memory_space<semaphore_mem>> -> memref<!tpu.dma_semaphore, #tpu.memory_space<semaphore_mem>>
    tpu.enqueue_dma source(%60 : memref<1x128xf32, #tpu.memory_space<any>>) target(%61 : memref<1x128xf32, #tpu.memory_space<vmem>>) target_semaphore(%63 : memref<!tpu.dma_semaphore, #tpu.memory_space<semaphore_mem>>)
    %c7_i32 = arith.constant 7 : i32
    %64 = arith.addi %0, %c7_i32 : i32
    %65 = arith.index_cast %64 : i32 to index
    %66 = memref.load %arg1[%65] : memref<8xi32, #tpu.memory_space<smem>>
    %c0_i32_41 = arith.constant 0 : i32
    %c15_i32_42 = arith.constant 15 : i32
    %67 = arith.maxsi %c0_i32_41, %66 : i32
    %68 = arith.minsi %c15_i32_42, %67 : i32
    %c7_i32_43 = arith.constant 7 : i32
    %c0_i32_44 = arith.constant 0 : i32
    %69 = tpu.memref_slice %arg2[%68, %c0_i32_44] : memref<16x128xf32, #tpu.memory_space<any>> -> memref<1x128xf32, #tpu.memory_space<any>>
    %c7_i32_45 = arith.constant 7 : i32
    %c0_i32_46 = arith.constant 0 : i32
    %70 = tpu.memref_slice %arg4[%c7_i32_45, %c0_i32_46] : memref<8x128xf32, #tpu.memory_space<vmem>> -> memref<1x128xf32, #tpu.memory_space<vmem>>
    %71 = tpu.memref_slice %arg5[%c7_i32_43] : memref<8x!tpu.dma_semaphore, #tpu.memory_space<semaphore_mem>> -> memref<1x!tpu.dma_semaphore, #tpu.memory_space<semaphore_mem>>
    %72 = tpu.memref_squeeze %71 : memref<1x!tpu.dma_semaphore, #tpu.memory_space<semaphore_mem>> -> memref<!tpu.dma_semaphore, #tpu.memory_space<semaphore_mem>>
    tpu.enqueue_dma source(%69 : memref<1x128xf32, #tpu.memory_space<any>>) target(%70 : memref<1x128xf32, #tpu.memory_space<vmem>>) target_semaphore(%72 : memref<!tpu.dma_semaphore, #tpu.memory_space<semaphore_mem>>)
    %c0_i32_47 = arith.constant 0 : i32
    %c0_i32_48 = arith.constant 0 : i32
    %c0_i32_49 = arith.constant 0 : i32
    %73 = tpu.memref_slice %arg2[%c0_i32_48, %c0_i32_49] : memref<16x128xf32, #tpu.memory_space<any>> -> memref<1x128xf32, #tpu.memory_space<any>>
    %c0_i32_50 = arith.constant 0 : i32
    %c0_i32_51 = arith.constant 0 : i32
    %74 = tpu.memref_slice %arg4[%c0_i32_50, %c0_i32_51] : memref<8x128xf32, #tpu.memory_space<vmem>> -> memref<1x128xf32, #tpu.memory_space<vmem>>
    %75 = tpu.memref_slice %arg5[%c0_i32_47] : memref<8x!tpu.dma_semaphore, #tpu.memory_space<semaphore_mem>> -> memref<1x!tpu.dma_semaphore, #tpu.memory_space<semaphore_mem>>
    %76 = tpu.memref_squeeze %75 : memref<1x!tpu.dma_semaphore, #tpu.memory_space<semaphore_mem>> -> memref<!tpu.dma_semaphore, #tpu.memory_space<semaphore_mem>>
    tpu.wait_dma2 semaphore(%76 : memref<!tpu.dma_semaphore, #tpu.memory_space<semaphore_mem>>) src(%73 : memref<1x128xf32, #tpu.memory_space<any>>) dst(%74 : memref<1x128xf32, #tpu.memory_space<vmem>>)
    %c1_i32_52 = arith.constant 1 : i32
    %c0_i32_53 = arith.constant 0 : i32
    %c0_i32_54 = arith.constant 0 : i32
    %77 = tpu.memref_slice %arg2[%c0_i32_53, %c0_i32_54] : memref<16x128xf32, #tpu.memory_space<any>> -> memref<1x128xf32, #tpu.memory_space<any>>
    %c1_i32_55 = arith.constant 1 : i32
    %c0_i32_56 = arith.constant 0 : i32
    %78 = tpu.memref_slice %arg4[%c1_i32_55, %c0_i32_56] : memref<8x128xf32, #tpu.memory_space<vmem>> -> memref<1x128xf32, #tpu.memory_space<vmem>>
    %79 = tpu.memref_slice %arg5[%c1_i32_52] : memref<8x!tpu.dma_semaphore, #tpu.memory_space<semaphore_mem>> -> memref<1x!tpu.dma_semaphore, #tpu.memory_space<semaphore_mem>>
    %80 = tpu.memref_squeeze %79 : memref<1x!tpu.dma_semaphore, #tpu.memory_space<semaphore_mem>> -> memref<!tpu.dma_semaphore, #tpu.memory_space<semaphore_mem>>
    tpu.wait_dma2 semaphore(%80 : memref<!tpu.dma_semaphore, #tpu.memory_space<semaphore_mem>>) src(%77 : memref<1x128xf32, #tpu.memory_space<any>>) dst(%78 : memref<1x128xf32, #tpu.memory_space<vmem>>)
    %c2_i32_57 = arith.constant 2 : i32
    %c0_i32_58 = arith.constant 0 : i32
    %c0_i32_59 = arith.constant 0 : i32
    %81 = tpu.memref_slice %arg2[%c0_i32_58, %c0_i32_59] : memref<16x128xf32, #tpu.memory_space<any>> -> memref<1x128xf32, #tpu.memory_space<any>>
    %c2_i32_60 = arith.constant 2 : i32
    %c0_i32_61 = arith.constant 0 : i32
    %82 = tpu.memref_slice %arg4[%c2_i32_60, %c0_i32_61] : memref<8x128xf32, #tpu.memory_space<vmem>> -> memref<1x128xf32, #tpu.memory_space<vmem>>
    %83 = tpu.memref_slice %arg5[%c2_i32_57] : memref<8x!tpu.dma_semaphore, #tpu.memory_space<semaphore_mem>> -> memref<1x!tpu.dma_semaphore, #tpu.memory_space<semaphore_mem>>
    %84 = tpu.memref_squeeze %83 : memref<1x!tpu.dma_semaphore, #tpu.memory_space<semaphore_mem>> -> memref<!tpu.dma_semaphore, #tpu.memory_space<semaphore_mem>>
    tpu.wait_dma2 semaphore(%84 : memref<!tpu.dma_semaphore, #tpu.memory_space<semaphore_mem>>) src(%81 : memref<1x128xf32, #tpu.memory_space<any>>) dst(%82 : memref<1x128xf32, #tpu.memory_space<vmem>>)
    %c3_i32_62 = arith.constant 3 : i32
    %c0_i32_63 = arith.constant 0 : i32
    %c0_i32_64 = arith.constant 0 : i32
    %85 = tpu.memref_slice %arg2[%c0_i32_63, %c0_i32_64] : memref<16x128xf32, #tpu.memory_space<any>> -> memref<1x128xf32, #tpu.memory_space<any>>
    %c3_i32_65 = arith.constant 3 : i32
    %c0_i32_66 = arith.constant 0 : i32
    %86 = tpu.memref_slice %arg4[%c3_i32_65, %c0_i32_66] : memref<8x128xf32, #tpu.memory_space<vmem>> -> memref<1x128xf32, #tpu.memory_space<vmem>>
    %87 = tpu.memref_slice %arg5[%c3_i32_62] : memref<8x!tpu.dma_semaphore, #tpu.memory_space<semaphore_mem>> -> memref<1x!tpu.dma_semaphore, #tpu.memory_space<semaphore_mem>>
    %88 = tpu.memref_squeeze %87 : memref<1x!tpu.dma_semaphore, #tpu.memory_space<semaphore_mem>> -> memref<!tpu.dma_semaphore, #tpu.memory_space<semaphore_mem>>
    tpu.wait_dma2 semaphore(%88 : memref<!tpu.dma_semaphore, #tpu.memory_space<semaphore_mem>>) src(%85 : memref<1x128xf32, #tpu.memory_space<any>>) dst(%86 : memref<1x128xf32, #tpu.memory_space<vmem>>)
    %c4_i32_67 = arith.constant 4 : i32
    %c0_i32_68 = arith.constant 0 : i32
    %c0_i32_69 = arith.constant 0 : i32
    %89 = tpu.memref_slice %arg2[%c0_i32_68, %c0_i32_69] : memref<16x128xf32, #tpu.memory_space<any>> -> memref<1x128xf32, #tpu.memory_space<any>>
    %c4_i32_70 = arith.constant 4 : i32
    %c0_i32_71 = arith.constant 0 : i32
    %90 = tpu.memref_slice %arg4[%c4_i32_70, %c0_i32_71] : memref<8x128xf32, #tpu.memory_space<vmem>> -> memref<1x128xf32, #tpu.memory_space<vmem>>
    %91 = tpu.memref_slice %arg5[%c4_i32_67] : memref<8x!tpu.dma_semaphore, #tpu.memory_space<semaphore_mem>> -> memref<1x!tpu.dma_semaphore, #tpu.memory_space<semaphore_mem>>
    %92 = tpu.memref_squeeze %91 : memref<1x!tpu.dma_semaphore, #tpu.memory_space<semaphore_mem>> -> memref<!tpu.dma_semaphore, #tpu.memory_space<semaphore_mem>>
    tpu.wait_dma2 semaphore(%92 : memref<!tpu.dma_semaphore, #tpu.memory_space<semaphore_mem>>) src(%89 : memref<1x128xf32, #tpu.memory_space<any>>) dst(%90 : memref<1x128xf32, #tpu.memory_space<vmem>>)
    %c5_i32_72 = arith.constant 5 : i32
    %c0_i32_73 = arith.constant 0 : i32
    %c0_i32_74 = arith.constant 0 : i32
    %93 = tpu.memref_slice %arg2[%c0_i32_73, %c0_i32_74] : memref<16x128xf32, #tpu.memory_space<any>> -> memref<1x128xf32, #tpu.memory_space<any>>
    %c5_i32_75 = arith.constant 5 : i32
    %c0_i32_76 = arith.constant 0 : i32
    %94 = tpu.memref_slice %arg4[%c5_i32_75, %c0_i32_76] : memref<8x128xf32, #tpu.memory_space<vmem>> -> memref<1x128xf32, #tpu.memory_space<vmem>>
    %95 = tpu.memref_slice %arg5[%c5_i32_72] : memref<8x!tpu.dma_semaphore, #tpu.memory_space<semaphore_mem>> -> memref<1x!tpu.dma_semaphore, #tpu.memory_space<semaphore_mem>>
    %96 = tpu.memref_squeeze %95 : memref<1x!tpu.dma_semaphore, #tpu.memory_space<semaphore_mem>> -> memref<!tpu.dma_semaphore, #tpu.memory_space<semaphore_mem>>
    tpu.wait_dma2 semaphore(%96 : memref<!tpu.dma_semaphore, #tpu.memory_space<semaphore_mem>>) src(%93 : memref<1x128xf32, #tpu.memory_space<any>>) dst(%94 : memref<1x128xf32, #tpu.memory_space<vmem>>)
    %c6_i32_77 = arith.constant 6 : i32
    %c0_i32_78 = arith.constant 0 : i32
    %c0_i32_79 = arith.constant 0 : i32
    %97 = tpu.memref_slice %arg2[%c0_i32_78, %c0_i32_79] : memref<16x128xf32, #tpu.memory_space<any>> -> memref<1x128xf32, #tpu.memory_space<any>>
    %c6_i32_80 = arith.constant 6 : i32
    %c0_i32_81 = arith.constant 0 : i32
    %98 = tpu.memref_slice %arg4[%c6_i32_80, %c0_i32_81] : memref<8x128xf32, #tpu.memory_space<vmem>> -> memref<1x128xf32, #tpu.memory_space<vmem>>
    %99 = tpu.memref_slice %arg5[%c6_i32_77] : memref<8x!tpu.dma_semaphore, #tpu.memory_space<semaphore_mem>> -> memref<1x!tpu.dma_semaphore, #tpu.memory_space<semaphore_mem>>
    %100 = tpu.memref_squeeze %99 : memref<1x!tpu.dma_semaphore, #tpu.memory_space<semaphore_mem>> -> memref<!tpu.dma_semaphore, #tpu.memory_space<semaphore_mem>>
    tpu.wait_dma2 semaphore(%100 : memref<!tpu.dma_semaphore, #tpu.memory_space<semaphore_mem>>) src(%97 : memref<1x128xf32, #tpu.memory_space<any>>) dst(%98 : memref<1x128xf32, #tpu.memory_space<vmem>>)
    %c7_i32_82 = arith.constant 7 : i32
    %c0_i32_83 = arith.constant 0 : i32
    %c0_i32_84 = arith.constant 0 : i32
    %101 = tpu.memref_slice %arg2[%c0_i32_83, %c0_i32_84] : memref<16x128xf32, #tpu.memory_space<any>> -> memref<1x128xf32, #tpu.memory_space<any>>
    %c7_i32_85 = arith.constant 7 : i32
    %c0_i32_86 = arith.constant 0 : i32
    %102 = tpu.memref_slice %arg4[%c7_i32_85, %c0_i32_86] : memref<8x128xf32, #tpu.memory_space<vmem>> -> memref<1x128xf32, #tpu.memory_space<vmem>>
    %103 = tpu.memref_slice %arg5[%c7_i32_82] : memref<8x!tpu.dma_semaphore, #tpu.memory_space<semaphore_mem>> -> memref<1x!tpu.dma_semaphore, #tpu.memory_space<semaphore_mem>>
    %104 = tpu.memref_squeeze %103 : memref<1x!tpu.dma_semaphore, #tpu.memory_space<semaphore_mem>> -> memref<!tpu.dma_semaphore, #tpu.memory_space<semaphore_mem>>
    tpu.wait_dma2 semaphore(%104 : memref<!tpu.dma_semaphore, #tpu.memory_space<semaphore_mem>>) src(%101 : memref<1x128xf32, #tpu.memory_space<any>>) dst(%102 : memref<1x128xf32, #tpu.memory_space<vmem>>)
    %c0 = arith.constant 0 : index
    %c0_87 = arith.constant 0 : index
    %105 = vector.load %arg4[%c0, %c0_87] : memref<8x128xf32, #tpu.memory_space<vmem>>, vector<8x128xf32>
    %c0_88 = arith.constant 0 : index
    %c0_89 = arith.constant 0 : index
    %106 = vector.load %arg3[%c0_88, %c0_89] : memref<8x128xf32, #tpu.memory_space<vmem>>, vector<8x128xf32>
    tpu.vector_store %arg3[%c0_88, %c0_89], %105 {strides = array<i32>} : memref<8x128xf32, #tpu.memory_space<vmem>>, vector<8x128xf32>,
    return
  }
  func.func @transform_1(%arg0: i32, %arg1: memref<8xi32, #tpu.memory_space<smem>>) -> (i32, i32) {
    %c0_i32 = arith.constant 0 : i32
    %c0_i32_0 = arith.constant 0 : i32
    return %arg0, %c0_i32 : i32, i32
  }
}

</mosaic_0001>

<llo_original>
// kernel: _gather_rows.1
$region0: #{_gather_rows.1}
  #allocation0 [shape = 'u32[]', space=smem, size = 0x4, offset = 0x4, fixed_abs, tag = 'smem constant byte address 0x4 - core index']
  #allocation1 [shape = 'u32[144,128]{1,0:T(1,128)}', space=vmem, size = 0x12000, scoped, tag = 'internal scratch']
  #allocation2 [shape = 'f32[8,128]{1,0:T(8,128)}', space=vmem, size = 0x1000, scoped, tag = 'scratch operand']
  #allocation3 [shape = 's32[8]{0}', space=sflag, size = 0x20, scoped, tag = 'scratch operand']
  #allocation4 [shape = 's32[1]{0}', space=sflag, size = 0x4, scoped, tag = 'scoped memory for _gather_rows.1']
  #allocation5 [shape = 'u8[512]{0}', space=smem, size = 0x200, scoped, tag = 'prefetched SMEM operand 0']
  #allocation8 [shape = 's32[]', space=sflag, size = 0x4, offset = 0, fixed_abs, tag = 'sflag constant byte address 0x0 - dummy sync flag']
  #allocation9 [shape = 's32[]', space=sflag, size = 0x4, offset = 0, fixed_abs, tag = 'sflag constant byte address 0x0 - dummy sync flag']
  #allocation10 [shape = 'u32[]', space=smem, size = 0x4, offset = 0x44, fixed_abs, tag = 'smem constant byte address 0x44 - assertion arg 0']
  #allocation11 [shape = 'u32[]', space=smem, size = 0x4, offset = 0x48, fixed_abs, tag = 'smem constant byte address 0x48 - assertion arg 1']
  #allocation12 [shape = 's32[]', space=sflag, size = 0x4, offset = 0, fixed_abs, tag = 'sflag constant byte address 0x0 - dummy sync flag']
  #allocation13 [shape = 's32[]', space=sflag, size = 0x4, offset = 0, fixed_abs, tag = 'sflag constant byte address 0x0 - dummy sync flag']
  #allocation14 [shape = 's32[]', space=sflag, size = 0x4, offset = 0, fixed_abs, tag = 'sflag constant byte address 0x0 - dummy sync flag']
  #allocation15 [shape = 's32[]', space=sflag, size = 0x4, offset = 0, fixed_abs, tag = 'sflag constant byte address 0x0 - dummy sync flag']
  #allocation16 [shape = 's32[]', space=sflag, size = 0x4, offset = 0, fixed_abs, tag = 'sflag constant byte address 0x0 - dummy sync flag']
  #allocation17 [shape = 's32[]', space=sflag, size = 0x4, offset = 0, fixed_abs, tag = 'sflag constant byte address 0x0 - dummy sync flag']
  #allocation18 [shape = 's32[]', space=sflag, size = 0x4, offset = 0, fixed_abs, tag = 'sflag constant byte address 0x0 - dummy sync flag']
  #allocation19 [shape = 's32[]', space=sflag, size = 0x4, offset = 0, fixed_abs, tag = 'sflag constant byte address 0x0 - dummy sync flag']
  #allocation20 [shape = 's32[]', space=sflag, size = 0x4, offset = 0, fixed_abs, tag = 'sflag constant byte address 0x0 - dummy sync flag']
  #allocation21 [shape = 's32[]', space=sflag, size = 0x4, offset = 0, fixed_abs, tag = 'sflag constant byte address 0x0 - dummy sync flag']
  #allocation22 [shape = 's32[]', space=sflag, size = 0x4, offset = 0, fixed_abs, tag = 'sflag constant byte address 0x0 - dummy sync flag']
  #allocation23 [shape = 's32[]', space=sflag, size = 0x4, offset = 0, fixed_abs, tag = 'sflag constant byte address 0x0 - dummy sync flag']
  #allocation24 [shape = 's32[]', space=sflag, size = 0x4, offset = 0, fixed_abs, tag = 'sflag constant byte address 0x0 - dummy sync flag']
  #allocation25 [shape = 's32[]', space=sflag, size = 0x4, offset = 0, fixed_abs, tag = 'sflag constant byte address 0x0 - dummy sync flag']
  %s0 = inlined_call_operand.vmem [shape: s32[8], index: 0, kind: input, shape index: {}]
  %s1 = inlined_call_operand.hbm [shape: f32[16,128], index: 1, kind: input, shape index: {}]
  %s2 = inlined_call_operand.hbm [shape: f32[8,128], index: 2, kind: output, shape index: {}]
  %s3 = sld [smem:[#allocation0]]
  $region42: #{_gather_rows.1} parent=0
    _
  %s5 = ssub.s32 1, %s3
  %s6 = scalar_select 0, %s5, %s3
  %s7 = sshll.u32 %s0, 4
  %s8 = int_to_ptr.vmem [resolvable:$true] %s7
  %10 = dma.vmem_to_smem %s8, 16, [#allocation5], [#allocation4]
  %11 = dma.done [#allocation4], 16
  %12 = sfence
  $region1: #{_gather_rows.1} parent=0
    #allocation6 [shape = 'u8[4096]{0}', space=vmem, size = 0x1000, scoped, tag = 'output window, operand 0, single buffered']
    #allocation7 [shape = 's32[1]{0}', space=sflag, size = 0x4, scoped, tag = 'scoped memory for _gather_rows.1']
    %13 = vsyncpa [#allocation7], 0
    %s14 = smul.u32 0, 8
    %s15 = sld [smem:[#allocation5 + %s14]]
    %p16 = scmp.gt.s32.totalorder %s15, 0
    %s17 = scalar_select %p16, %s15, 0
    %p18 = scmp.lt.s32.totalorder %s17, 15
    %s19 = scalar_select %p18, %s17, 15
    %s20 = smul.addr %s19, 16
    %s21 = scalar_lea.hbm %s1, %s20
    // Predicated region
    $region2: #{_gather_rows.1} parent=1 // pred_check
      _
    $region3: #{_gather_rows.1} parent=1 // pred_check_branch
      %23 = sbr.rel target = $region5
    $region4: #{_gather_rows.1} parent=1 // pred_region
      %24 = sst [smem:[#allocation10]] [#allocation9]
      %25 = sst [smem:[#allocation11]] [#allocation8]
    $region5: #{_gather_rows.1} parent=1 // pred_fallthru
      _
    %27 = shalt.err (0)
    %s29 = sshll.u32 [#allocation2], 4
    %s30 = int_to_ptr.vmem [resolvable:$true] %s29
    %32 = dma.hbm_to_vmem [thread:$0]  %s21, 16, %s30, [#allocation3]
    %s33 = sadd.s32 %s14, 1
    %s34 = sld [smem:[#allocation5 + %s33]]
    %p35 = scmp.gt.s32.totalorder %s34, 0
    %s36 = scalar_select %p35, %s34, 0
    %p37 = scmp.lt.s32.totalorder %s36, 15
    %s38 = scalar_select %p37, %s36, 15
    %s39 = smul.addr %s38, 16
    %s40 = scalar_lea.hbm %s1, %s39
    %s41 = scalar_lea.vmem [#allocation2], 1
    %s42 = scalar_lea.sflag [#allocation3], 1
    // Predicated region
    $region6: #{_gather_rows.1} parent=1 // pred_check
      _
    $region7: #{_gather_rows.1} parent=1 // pred_check_branch
      %44 = sbr.rel target = $region9
    $region8: #{_gather_rows.1} parent=1 // pred_region
      %45 = sst [smem:[#allocation10]] [#allocation13]
      %46 = sst [smem:[#allocation11]] [#allocation12]
    $region9: #{_gather_rows.1} parent=1 // pred_fallthru
      _
    %48 = shalt.err (0)
    %s50 = sshll.u32 %s41, 4
    %s51 = int_to_ptr.vmem [resolvable:$true] %s50
    %53 = dma.hbm_to_vmem [thread:$0]  %s40, 16, %s51, %s42
    %s54 = sadd.s32 %s14, 2
    %s55 = sld [smem:[#allocation5 + %s54]]
    %p56 = scmp.gt.s32.totalorder %s55, 0
    %s57 = scalar_select %p56, %s55, 0
    %p58 = scmp.lt.s32.totalorder %s57, 15
    %s59 = scalar_select %p58, %s57, 15
    %s60 = smul.addr %s59, 16
    %s61 = scalar_lea.hbm %s1, %s60
    %s62 = scalar_lea.vmem [#allocation2], 2
    %s63 = scalar_lea.sflag [#allocation3], 2
    // Predicated region
    $region10: #{_gather_rows.1} parent=1 // pred_check
      _
    $region11: #{_gather_rows.1} parent=1 // pred_check_branch
      %65 = sbr.rel target = $region13
    $region12: #{_gather_rows.1} parent=1 // pred_region
      %66 = sst [smem:[#allocation10]] [#allocation15]
      %67 = sst [smem:[#allocation11]] [#allocation14]
    $region13: #{_gather_rows.1} parent=1 // pred_fallthru
      _
    %69 = shalt.err (0)
    %s71 = sshll.u32 %s62, 4
    %s72 = int_to_ptr.vmem [resolvable:$true] %s71
    %74 = dma.hbm_to_vmem [thread:$0]  %s61, 16, %s72, %s63
    %s75 = sadd.s32 %s14, 3
    %s76 = sld [smem:[#allocation5 + %s75]]
    %p77 = scmp.gt.s32.totalorder %s76, 0
    %s78 = scalar_select %p77, %s76, 0
    %p79 = scmp.lt.s32.totalorder %s78, 15
    %s80 = scalar_select %p79, %s78, 15
    %s81 = smul.addr %s80, 16
    %s82 = scalar_lea.hbm %s1, %s81
    %s83 = scalar_lea.vmem [#allocation2], 3
    %s84 = scalar_lea.sflag [#allocation3], 3
    // Predicated region
    $region14: #{_gather_rows.1} parent=1 // pred_check
      _
    $region15: #{_gather_rows.1} parent=1 // pred_check_branch
      %86 = sbr.rel target = $region17
    $region16: #{_gather_rows.1} parent=1 // pred_region
      %87 = sst [smem:[#allocation10]] [#allocation17]
      %88 = sst [smem:[#allocation11]] [#allocation16]
    $region17: #{_gather_rows.1} parent=1 // pred_fallthru
      _
    %90 = shalt.err (0)
    %s92 = sshll.u32 %s83, 4
    %s93 = int_to_ptr.vmem [resolvable:$true] %s92
    %95 = dma.hbm_to_vmem [thread:$0]  %s82, 16, %s93, %s84
    %s96 = sadd.s32 %s14, 4
    %s97 = sld [smem:[#allocation5 + %s96]]
    %p98 = scmp.gt.s32.totalorder %s97, 0
    %s99 = scalar_select %p98, %s97, 0
    %p100 = scmp.lt.s32.totalorder %s99, 15
    %s101 = scalar_select %p100, %s99, 15
    %s102 = smul.addr %s101, 16
    %s103 = scalar_lea.hbm %s1, %s102
    %s104 = scalar_lea.vmem [#allocation2], 4
    %s105 = scalar_lea.sflag [#allocation3], 4
    // Predicated region
    $region18: #{_gather_rows.1} parent=1 // pred_check
      _
    $region19: #{_gather_rows.1} parent=1 // pred_check_branch
      %107 = sbr.rel target = $region21
    $region20: #{_gather_rows.1} parent=1 // pred_region
      %108 = sst [smem:[#allocation10]] [#allocation19]
      %109 = sst [smem:[#allocation11]] [#allocation18]
    $region21: #{_gather_rows.1} parent=1 // pred_fallthru
      _
    %111 = shalt.err (0)
    %s113 = sshll.u32 %s104, 4
    %s114 = int_to_ptr.vmem [resolvable:$true] %s113
    %116 = dma.hbm_to_vmem [thread:$0]  %s103, 16, %s114, %s105
    %s117 = sadd.s32 %s14, 5
    %s118 = sld [smem:[#allocation5 + %s117]]
    %p119 = scmp.gt.s32.totalorder %s118, 0
    %s120 = scalar_select %p119, %s118, 0
    %p121 = scmp.lt.s32.totalorder %s120, 15
    %s122 = scalar_select %p121, %s120, 15
    %s123 = smul.addr %s122, 16
    %s124 = scalar_lea.hbm %s1, %s123
    %s125 = scalar_lea.vmem [#allocation2], 5
    %s126 = scalar_lea.sflag [#allocation3], 5
    // Predicated region
    $region22: #{_gather_rows.1} parent=1 // pred_check
      _
    $region23: #{_gather_rows.1} parent=1 // pred_check_branch
      %128 = sbr.rel target = $region25
    $region24: #{_gather_rows.1} parent=1 // pred_region
      %129 = sst [smem:[#allocation10]] [#allocation21]
      %130 = sst [smem:[#allocation11]] [#allocation20]
    $region25: #{_gather_rows.1} parent=1 // pred_fallthru
      _
    %132 = shalt.err (0)
    %s134 = sshll.u32 %s125, 4
    %s135 = int_to_ptr.vmem [resolvable:$true] %s134
    %137 = dma.hbm_to_vmem [thread:$0]  %s124, 16, %s135, %s126
    %s138 = sadd.s32 %s14, 6
    %s139 = sld [smem:[#allocation5 + %s138]]
    %p140 = scmp.gt.s32.totalorder %s139, 0
    %s141 = scalar_select %p140, %s139, 0
    %p142 = scmp.lt.s32.totalorder %s141, 15
    %s143 = scalar_select %p142, %s141, 15
    %s144 = smul.addr %s143, 16
    %s145 = scalar_lea.hbm %s1, %s144
    %s146 = scalar_lea.vmem [#allocation2], 6
    %s147 = scalar_lea.sflag [#allocation3], 6
    // Predicated region
    $region26: #{_gather_rows.1} parent=1 // pred_check
      _
    $region27: #{_gather_rows.1} parent=1 // pred_check_branch
      %149 = sbr.rel target = $region29
    $region28: #{_gather_rows.1} parent=1 // pred_region
      %150 = sst [smem:[#allocation10]] [#allocation23]
      %151 = sst [smem:[#allocation11]] [#allocation22]
    $region29: #{_gather_rows.1} parent=1 // pred_fallthru
      _
    %153 = shalt.err (0)
    %s155 = sshll.u32 %s146, 4
    %s156 = int_to_ptr.vmem [resolvable:$true] %s155
    %158 = dma.hbm_to_vmem [thread:$0]  %s145, 16, %s156, %s147
    %s159 = sadd.s32 %s14, 7
    %s160 = sld [smem:[#allocation5 + %s159]]
    %p161 = scmp.gt.s32.totalorder %s160, 0
    %s162 = scalar_select %p161, %s160, 0
    %p163 = scmp.lt.s32.totalorder %s162, 15
    %s164 = scalar_select %p163, %s162, 15
    %s165 = smul.addr %s164, 16
    %s166 = scalar_lea.hbm %s1, %s165
    %s167 = scalar_lea.vmem [#allocation2], 7
    %s168 = scalar_lea.sflag [#allocation3], 7
    // Predicated region
    $region30: #{_gather_rows.1} parent=1 // pred_check
      _
    $region31: #{_gather_rows.1} parent=1 // pred_check_branch
      %170 = sbr.rel target = $region33
    $region32: #{_gather_rows.1} parent=1 // pred_region
      %171 = sst [smem:[#allocation10]] [#allocation25]
      %172 = sst [smem:[#allocation11]] [#allocation24]
    $region33: #{_gather_rows.1} parent=1 // pred_fallthru
      _
    %174 = shalt.err (0)
    %s176 = sshll.u32 %s167, 4
    %s177 = int_to_ptr.vmem [resolvable:$true] %s176
    %179 = dma.hbm_to_vmem [thread:$0]  %s166, 16, %s177, %s168
    %s180 = smul.u32 1, 1
    %s181 = sshll.u32 %s180, 4
    %182 = dma.done [#allocation3], %s181
    %s183 = sshll.u32 %s180, 4
    %184 = dma.done %s42, %s183
    %s185 = sshll.u32 %s180, 4
    %186 = dma.done %s63, %s185
    %s187 = sshll.u32 %s180, 4
    %188 = dma.done %s84, %s187
    %s189 = sshll.u32 %s180, 4
    %190 = dma.done %s105, %s189
    %s191 = sshll.u32 %s180, 4
    %192 = dma.done %s126, %s191
    %s193 = sshll.u32 %s180, 4
    %194 = dma.done %s147, %s193
    %s195 = sshll.u32 %s180, 4
    %196 = dma.done %s168, %s195
    %v197 = vld [vmem:[#allocation2] sm:$0xff]
    %198 = vst [vmem:[#allocation6] sm:$0xff] %v197
    // Predicated region
    $region34: #{_gather_rows.1} parent=1 // pred_check
      _
    $region35: #{_gather_rows.1} parent=1 // pred_check_branch
      %200 = sbr.rel (0) target = $region37
    $region36: #{_gather_rows.1} parent=1 // pred_region
      %s202 = ssub.s32 128, 128
      %203 = vsyncadd [#allocation7], %s202
      %s205 = sshll.u32 [#allocation6], 4
      %s206 = int_to_ptr.vmem [resolvable:$true] %s205
      %208 = dma.vmem_to_hbm [thread:$0]  %s206, 128, %s2, [#allocation7]
    $region37: #{_gather_rows.1} parent=1 // pred_fallthru
      _
    // Predicated region
    $region38: #{_gather_rows.1} parent=1 // pred_check
      _
    $region39: #{_gather_rows.1} parent=1 // pred_check_branch
      %210 = sbr.rel (0) target = $region41
    $region40: #{_gather_rows.1} parent=1 // pred_region
      %211 = dma.done [#allocation7], 128
    $region41: #{_gather_rows.1} parent=1 // pred_fallthru
      _
    %212 = vsyncpa [#allocation7], 1
  %213 = vsyncmov [#allocation3]
  %s214 = vpop.sfrf %213
  %p215 = scmp.eq.s32.totalorder %s214, 0
  %p216 = pneg %p215
  %218 = shalt.err (%p216)
  %s219 = scalar_lea.sflag [#allocation3], 1
  %220 = vsyncmov %s219
  %s221 = vpop.sfrf %220
  %p222 = scmp.eq.s32.totalorder %s221, 0
  %p223 = pneg %p222
  %225 = shalt.err (%p223)
  %s226 = scalar_lea.sflag [#allocation3], 2
  %227 = vsyncmov %s226
  %s228 = vpop.sfrf %227
  %p229 = scmp.eq.s32.totalorder %s228, 0
  %p230 = pneg %p229
  %232 = shalt.err (%p230)
  %s233 = scalar_lea.sflag [#allocation3], 3
  %234 = vsyncmov %s233
  %s235 = vpop.sfrf %234
  %p236 = scmp.eq.s32.totalorder %s235, 0
  %p237 = pneg %p236
  %239 = shalt.err (%p237)
  %s240 = scalar_lea.sflag [#allocation3], 4
  %241 = vsyncmov %s240
  %s242 = vpop.sfrf %241
  %p243 = scmp.eq.s32.totalorder %s242, 0
  %p244 = pneg %p243
  %246 = shalt.err (%p244)
  %s247 = scalar_lea.sflag [#allocation3], 5
  %248 = vsyncmov %s247
  %s249 = vpop.sfrf %248
  %p250 = scmp.eq.s32.totalorder %s249, 0
  %p251 = pneg %p250
  %253 = shalt.err (%p251)
  %s254 = scalar_lea.sflag [#allocation3], 6
  %255 = vsyncmov %s254
  %s256 = vpop.sfrf %255
  %p257 = scmp.eq.s32.totalorder %s256, 0
  %p258 = pneg %p257
  %260 = shalt.err (%p258)
  %s261 = scalar_lea.sflag [#allocation3], 7
  %262 = vsyncmov %s261
  %s263 = vpop.sfrf %262
  %p264 = scmp.eq.s32.totalorder %s263, 0
  %p265 = pneg %p264
  %267 = shalt.err (%p265)

</llo_original>
